<compile_context>
chip_gen: v6e
topology: v6e:2x2x1
jax: 0.10.0
libtpu: 0.0.40
codegen_flags: <defaults>
</compile_context>

<pallas_src>
import functools

import jax
import jax.numpy as jnp
from jax.experimental import pallas as pl
from jax.experimental.pallas import tpu as pltpu


def _round_up(n: int, m: int) -> int:
    return ((n + m - 1) // m) * m


def _make_aggnet_kernel(num_residual_blocks: int):
    """Fused MLP kernel for a fixed number of residual blocks.

    Ref layout (all VMEM blocks):
      [0] x1 (TB, d1p)   [1] x2 (TB, d2p)
      [2] W0a (d1p, H)   [3] W0b (d2p, H)   [4] b0 (1, H)
      then per residual block: W1 (H,H), b1 (1,H), W2 (H,H), b2 (1,H)
      then Wout (H, out_dim), bout (1, out_dim)
      last: out (TB, out_dim)
    """

    def kernel(*refs):
        x1_ref, x2_ref = refs[0], refs[1]
        w0a_ref, w0b_ref, b0_ref = refs[2], refs[3], refs[4]
        idx = 5
        mxu_dtype = w0a_ref.dtype  # bf16 (or f32) -- MXU input dtype

        def matmul(act_f32, w_ref):
            # MXU matmul in the weight dtype, f32 accumulation.
            return jnp.dot(
                act_f32.astype(mxu_dtype),
                w_ref[...],
                preferred_element_type=jnp.float32,
            )

        def bias(b_ref):
            return b_ref[...].astype(jnp.float32)

        # Input Linear + ReLU.  Concat folded into a split weight:
        #   concat([x1, x2], 1) @ W0  ==  x1 @ W0[:d1] + x2 @ W0[d1:]
        h = matmul(x1_ref[...], w0a_ref)
        h = h + matmul(x2_ref[...], w0b_ref)
        h = jnp.maximum(h + bias(b0_ref), 0.0)
        # Dropout after the input layer is identity at inference.

        # Residual blocks (hidden -> hidden, so skip_connection == Identity).
        for _ in range(num_residual_blocks):
            w1_ref, b1_ref, w2_ref, b2_ref = refs[idx : idx + 4]
            idx += 4
            identity = h
            t = jnp.maximum(matmul(h, w1_ref) + bias(b1_ref), 0.0)
            # Dropout between linear1 and linear2 is identity at inference.
            t = matmul(t, w2_ref) + bias(b2_ref)
            h = jnp.maximum(t + identity, 0.0)

        wout_ref, bout_ref, out_ref = refs[idx], refs[idx + 1], refs[idx + 2]
        out = matmul(h, wout_ref) + bias(bout_ref)
        # Narrow (tb, out_dim) store: block last dim == full array dim, so no
        # 128-lane padding is written back to HBM.
        out_ref[...] = out.astype(out_ref.dtype)

    return kernel


def init_params(key, input_dim, output_dim, num_residual_blocks, hidden_dim):
    """Deterministic init mimicking nn.Linear default (U[-1/sqrt(fan_in), +])."""

    def linear(key, fan_in, fan_out):
        kw, kb = jax.random.split(key)
        bound = 1.0 / jnp.sqrt(jnp.float32(fan_in))
        w = jax.random.uniform(
            kw, (fan_in, fan_out), jnp.float32, minval=-bound, maxval=bound
        )
        b = jax.random.uniform(
            kb, (1, fan_out), jnp.float32, minval=-bound, maxval=bound
        )
        return w, b

    keys = jax.random.split(key, 2 + 2 * num_residual_blocks)
    params = []
    params.extend(linear(keys[0], input_dim, hidden_dim))  # W0, b0
    for i in range(num_residual_blocks):
        params.extend(linear(keys[1 + 2 * i], hidden_dim, hidden_dim))  # W1, b1
        params.extend(linear(keys[2 + 2 * i], hidden_dim, hidden_dim))  # W2, b2
    params.extend(linear(keys[-1], hidden_dim, output_dim))  # Wout, bout
    return params


def _pick_batch_tile(batch: int, block_batch) -> int:
    """Batch tile: 8-aligned, capped by batch, >=2 grid steps for big batches."""
    if block_batch is not None:
        return _round_up(max(int(block_batch), 8), 8)  # enforce sublane alignment
    aligned = _round_up(max(batch, 1), 8)
    if aligned <= 512:
        # Small batch: one tile exactly the (8-aligned) batch -- no over-padding.
        return aligned
    # Large batch: big 256-aligned tiles (amortize ~0.35 us/step overhead),
    # capped at 4096, and chosen so grid >= 2 (keeps both v7x TCs busy).
    return min(4096, max(256, ((aligned // 2) // 256) * 256))


@functools.partial(
    jax.jit, static_argnames=("num_residual_blocks", "param_dtype", "block_batch")
)
def aggregate_net_forward(
    x1,
    x2,
    params,
    *,
    num_residual_blocks,
    param_dtype=jnp.bfloat16,
    block_batch=None,
):
    batch, d1 = x1.shape
    d2 = x2.shape[1]
    hidden = params[0].shape[1]
    out_dim = params[-1].shape[1]

    cast = lambda p: p.astype(param_dtype)

    # --- split + pad the input Linear weight (kills the activation concat) ----
    d1p, d2p = _round_up(d1, 8), _round_up(d2, 8)
    if d1p != d1:
        x1 = jnp.pad(x1, ((0, 0), (0, d1p - d1)))
    if d2p != d2:
        x2 = jnp.pad(x2, ((0, 0), (0, d2p - d2)))
    w0 = cast(params[0])
    w0a = jnp.pad(w0[:d1, :], ((0, d1p - d1), (0, 0)))
    w0b = jnp.pad(w0[d1:, :], ((0, d2p - d2), (0, 0)))

    kernel_params = [w0a, w0b, cast(params[1])]
    for i in range(num_residual_blocks):
        base = 2 + 4 * i
        kernel_params.extend(cast(p) for p in params[base : base + 4])
    # Output layer weights are NOT column-padded: the output stays out_dim wide.
    kernel_params.extend([cast(params[-2]), cast(params[-1])])

    # --- batch tile / grid ----------------------------------------------------
    tb = _pick_batch_tile(batch, block_batch)
    b_pad = _round_up(batch, tb)
    if b_pad != batch:
        x1 = jnp.pad(x1, ((0, b_pad - batch), (0, 0)))
        x2 = jnp.pad(x2, ((0, b_pad - batch), (0, 0)))
    grid = (b_pad // tb,)

    # x / out tiles move with the batch grid (double-buffered by Pallas);
    # weights/biases map to block (0, 0) every step -> single DMA, VMEM-resident.
    x_spec = lambda d: pl.BlockSpec((tb, d), lambda i: (i, 0))
    w_spec = lambda p: pl.BlockSpec(p.shape, lambda i: (0, 0))
    in_specs = [x_spec(d1p), x_spec(d2p)] + [w_spec(p) for p in kernel_params]
    out_specs = pl.BlockSpec((tb, out_dim), lambda i: (i, 0))

    flops = 2 * b_pad * (
        (d1p + d2p) * hidden
        + 2 * num_residual_blocks * hidden * hidden
        + hidden * out_dim
    )
    bytes_params = sum(int(p.size) * p.dtype.itemsize for p in kernel_params)
    bytes_accessed = (
        int(x1.size) * x1.dtype.itemsize
        + int(x2.size) * x2.dtype.itemsize
        + bytes_params
        + b_pad * out_dim * 4
    )

    kernel = _make_aggnet_kernel(num_residual_blocks)
    out = pl.pallas_call(
        kernel,
        out_shape=jax.ShapeDtypeStruct((b_pad, out_dim), jnp.float32),
        grid=grid,
        in_specs=in_specs,
        out_specs=out_specs,
        compiler_params=pltpu.CompilerParams(
            # Batch axis is independent -> shards across both TCs on v7x.
            dimension_semantics=("parallel",),
        ),
        cost_estimate=pl.CostEstimate(
            flops=flops, transcendentals=0, bytes_accessed=bytes_accessed
        ),
    )(x1, x2, *kernel_params)
    return out[:batch]


def _reference_forward(x1, x2, params, num_residual_blocks, mxu_dtype=jnp.float32):
    """Pure-JAX reference (same matmul dtype as the kernel, f32 accumulation)."""
    params = [p.astype(mxu_dtype) for p in params]

    def mm(a, w):
        return jnp.dot(a.astype(mxu_dtype), w, preferred_element_type=jnp.float32)

    def bias(b):
        return b.astype(jnp.float32)

    x = jnp.concatenate([x1, x2], axis=1)
    idx = 0
    w0, b0 = params[idx], params[idx + 1]
    idx += 2
    h = jnp.maximum(mm(x, w0) + bias(b0), 0.0)
    for _ in range(num_residual_blocks):
        w1, b1, w2, b2 = params[idx : idx + 4]
        idx += 4
        identity = h
        t = jnp.maximum(mm(h, w1) + bias(b1), 0.0)
        t = mm(t, w2) + bias(b2)
        h = jnp.maximum(t + identity, 0.0)
    wout, bout = params[idx], params[idx + 1]
    return mm(h, wout) + bias(bout)


if __name__ == "__main__":
    # Small deterministic example consistent with the module's forward:
    # two feature tables (concatenated along dim=1 in the original code).
    d1, d2 = 5, 3          # x1 / x2 feature dims -> input_dim = 8
    input_dim = d1 + d2
    hidden_dim = 32
    output_dim = 4
    num_residual_blocks = 2

    key = jax.random.PRNGKey(0)
    k_x1, k_x2, k_params = jax.random.split(key, 3)
    params = init_params(
        k_params, input_dim, output_dim, num_residual_blocks, hidden_dim
    )

    # --- case 1: tiny batch, f32 weights (tight check of the fused math) ------
    batch = 8
    x1 = jax.random.normal(k_x1, (batch, d1), jnp.float32)
    x2 = jax.random.normal(k_x2, (batch, d2), jnp.float32)
    out_f32 = aggregate_net_forward(
        x1, x2, params,
        num_residual_blocks=num_residual_blocks,
        param_dtype=jnp.float32,
    )
    out_f32 = jax.block_until_ready(out_f32)
    ref_f32 = _reference_forward(x1, x2, params, num_residual_blocks, jnp.float32)
    assert out_f32.shape == (batch, output_dim)
    assert jnp.allclose(out_f32, ref_f32, atol=1e-4, rtol=1e-4)

    # --- case 2: tiny batch, bf16 weights (native MXU dtype), f32 accumulation -
    out_bf16 = aggregate_net_forward(
        x1, x2, params,
        num_residual_blocks=num_residual_blocks,
        param_dtype=jnp.bfloat16,
    )
    out_bf16 = jax.block_until_ready(out_bf16)
    ref_bf16 = _reference_forward(x1, x2, params, num_residual_blocks, jnp.bfloat16)
    assert out_bf16.shape == (batch, output_dim)
    assert jnp.allclose(out_bf16, ref_bf16, atol=5e-3, rtol=5e-3)

    # --- case 3: batch > 512 -> multi-tile grid (>=2 steps) + batch padding ----
    batch_big = 600
    x1b = jax.random.normal(k_x1, (batch_big, d1), jnp.float32)
    x2b = jax.random.normal(k_x2, (batch_big, d2), jnp.float32)
    out_big = aggregate_net_forward(
        x1b, x2b, params,
        num_residual_blocks=num_residual_blocks,
        param_dtype=jnp.float32,
    )
    out_big = jax.block_until_ready(out_big)
    ref_big = _reference_forward(x1b, x2b, params, num_residual_blocks, jnp.float32)
    assert out_big.shape == (batch_big, output_dim)
    assert jnp.allclose(out_big, ref_big, atol=1e-4, rtol=1e-4)

    print("KERNEL_OK")
</pallas_src>

<mosaic_0001>
module attributes {stable_mosaic.version = 11 : i64} {
  func.func @kernel(%arg0: i32, %arg1: memref<8x8xf32, #tpu.memory_space<vmem>>, %arg2: memref<8x8xf32, #tpu.memory_space<vmem>>, %arg3: memref<8x32xf32, #tpu.memory_space<vmem>>, %arg4: memref<8x32xf32, #tpu.memory_space<vmem>>, %arg5: memref<1x32xf32, #tpu.memory_space<vmem>>, %arg6: memref<32x32xf32, #tpu.memory_space<vmem>>, %arg7: memref<1x32xf32, #tpu.memory_space<vmem>>, %arg8: memref<32x32xf32, #tpu.memory_space<vmem>>, %arg9: memref<1x32xf32, #tpu.memory_space<vmem>>, %arg10: memref<32x32xf32, #tpu.memory_space<vmem>>, %arg11: memref<1x32xf32, #tpu.memory_space<vmem>>, %arg12: memref<32x32xf32, #tpu.memory_space<vmem>>, %arg13: memref<1x32xf32, #tpu.memory_space<vmem>>, %arg14: memref<32x4xf32, #tpu.memory_space<vmem>>, %arg15: memref<1x4xf32, #tpu.memory_space<vmem>>, %arg16: memref<8x4xf32, #tpu.memory_space<vmem>>) attributes {dimension_semantics = [#tpu.dimension_semantics<parallel>], iteration_bounds = array<i64: 1>, scalar_prefetch = 0 : i64, scratch_operands = 0 : i64, tpu.core_type = #tpu.core_type<tc>, window_params = [{transform_indices = @transform_0, window_bounds = array<i64: 8, 8>}, {transform_indices = @transform_1, window_bounds = array<i64: 8, 8>}, {pipeline_mode = #tpu.pipeline_mode<synchronous>, transform_indices = @transform_2, window_bounds = array<i64: 8, 32>}, {pipeline_mode = #tpu.pipeline_mode<synchronous>, transform_indices = @transform_3, window_bounds = array<i64: 8, 32>}, {pipeline_mode = #tpu.pipeline_mode<synchronous>, transform_indices = @transform_4, window_bounds = array<i64: 1, 32>}, {pipeline_mode = #tpu.pipeline_mode<synchronous>, transform_indices = @transform_5, window_bounds = array<i64: 32, 32>}, {pipeline_mode = #tpu.pipeline_mode<synchronous>, transform_indices = @transform_6, window_bounds = array<i64: 1, 32>}, {pipeline_mode = #tpu.pipeline_mode<synchronous>, transform_indices = @transform_7, window_bounds = array<i64: 32, 32>}, {pipeline_mode = #tpu.pipeline_mode<synchronous>, transform_indices = @transform_8, window_bounds = array<i64: 1, 32>}, {pipeline_mode = #tpu.pipeline_mode<synchronous>, transform_indices = @transform_9, window_bounds = array<i64: 32, 32>}, {pipeline_mode = #tpu.pipeline_mode<synchronous>, transform_indices = @transform_10, window_bounds = array<i64: 1, 32>}, {pipeline_mode = #tpu.pipeline_mode<synchronous>, transform_indices = @transform_11, window_bounds = array<i64: 32, 32>}, {pipeline_mode = #tpu.pipeline_mode<synchronous>, transform_indices = @transform_12, window_bounds = array<i64: 1, 32>}, {pipeline_mode = #tpu.pipeline_mode<synchronous>, transform_indices = @transform_13, window_bounds = array<i64: 32, 4>}, {pipeline_mode = #tpu.pipeline_mode<synchronous>, transform_indices = @transform_14, window_bounds = array<i64: 1, 4>}, {transform_indices = @transform_15, window_bounds = array<i64: 8, 4>}]} {
    %c0 = arith.constant 0 : index
    %c0_0 = arith.constant 0 : index
    %0 = vector.load %arg1[%c0, %c0_0] : memref<8x8xf32, #tpu.memory_space<vmem>>, vector<8x8xf32>
    %c0_1 = arith.constant 0 : index
    %c0_2 = arith.constant 0 : index
    %1 = vector.load %arg3[%c0_1, %c0_2] : memref<8x32xf32, #tpu.memory_space<vmem>>, vector<8x32xf32>
    %cst = arith.constant dense<0.000000e+00> : vector<8x32xf32>
    %2 = tpu.matmul %0, %1, %cst {dimension_numbers = #tpu.dot_dimension_numbers<[1], [0], [0], [1], [0, 0, 1, 1], [], []>} : vector<8x8xf32>, vector<8x32xf32>, vector<8x32xf32> -> vector<8x32xf32>
    %c0_3 = arith.constant 0 : index
    %c0_4 = arith.constant 0 : index
    %3 = vector.load %arg2[%c0_3, %c0_4] : memref<8x8xf32, #tpu.memory_space<vmem>>, vector<8x8xf32>
    %c0_5 = arith.constant 0 : index
    %c0_6 = arith.constant 0 : index
    %4 = vector.load %arg4[%c0_5, %c0_6] : memref<8x32xf32, #tpu.memory_space<vmem>>, vector<8x32xf32>
    %cst_7 = arith.constant dense<0.000000e+00> : vector<8x32xf32>
    %5 = tpu.matmul %3, %4, %cst_7 {dimension_numbers = #tpu.dot_dimension_numbers<[1], [0], [0], [1], [0, 0, 1, 1], [], []>} : vector<8x8xf32>, vector<8x32xf32>, vector<8x32xf32> -> vector<8x32xf32>
    %6 = arith.addf %2, %5 : vector<8x32xf32>
    %c0_8 = arith.constant 0 : index
    %c0_9 = arith.constant 0 : index
    %7 = vector.load %arg5[%c0_8, %c0_9] : memref<1x32xf32, #tpu.memory_space<vmem>>, vector<1x32xf32>
    %8 = vector.broadcast %7 : vector<1x32xf32> to vector<8x32xf32>
    %9 = arith.addf %6, %8 : vector<8x32xf32>
    %cst_10 = arith.constant 0.000000e+00 : f32
    %10 = vector.broadcast %cst_10 : f32 to vector<8x32xf32>
    %11 = arith.maximumf %9, %10 : vector<8x32xf32>
    %c0_11 = arith.constant 0 : index
    %c0_12 = arith.constant 0 : index
    %12 = vector.load %arg6[%c0_11, %c0_12] : memref<32x32xf32, #tpu.memory_space<vmem>>, vector<32x32xf32>
    %cst_13 = arith.constant dense<0.000000e+00> : vector<8x32xf32>
    %13 = tpu.matmul %11, %12, %cst_13 {dimension_numbers = #tpu.dot_dimension_numbers<[1], [0], [0], [1], [0, 0, 1, 1], [], []>} : vector<8x32xf32>, vector<32x32xf32>, vector<8x32xf32> -> vector<8x32xf32>
    %c0_14 = arith.constant 0 : index
    %c0_15 = arith.constant 0 : index
    %14 = vector.load %arg7[%c0_14, %c0_15] : memref<1x32xf32, #tpu.memory_space<vmem>>, vector<1x32xf32>
    %15 = vector.broadcast %14 : vector<1x32xf32> to vector<8x32xf32>
    %16 = arith.addf %13, %15 : vector<8x32xf32>
    %cst_16 = arith.constant 0.000000e+00 : f32
    %17 = vector.broadcast %cst_16 : f32 to vector<8x32xf32>
    %18 = arith.maximumf %16, %17 : vector<8x32xf32>
    %c0_17 = arith.constant 0 : index
    %c0_18 = arith.constant 0 : index
    %19 = vector.load %arg8[%c0_17, %c0_18] : memref<32x32xf32, #tpu.memory_space<vmem>>, vector<32x32xf32>
    %cst_19 = arith.constant dense<0.000000e+00> : vector<8x32xf32>
    %20 = tpu.matmul %18, %19, %cst_19 {dimension_numbers = #tpu.dot_dimension_numbers<[1], [0], [0], [1], [0, 0, 1, 1], [], []>} : vector<8x32xf32>, vector<32x32xf32>, vector<8x32xf32> -> vector<8x32xf32>
    %c0_20 = arith.constant 0 : index
    %c0_21 = arith.constant 0 : index
    %21 = vector.load %arg9[%c0_20, %c0_21] : memref<1x32xf32, #tpu.memory_space<vmem>>, vector<1x32xf32>
    %22 = vector.broadcast %21 : vector<1x32xf32> to vector<8x32xf32>
    %23 = arith.addf %20, %22 : vector<8x32xf32>
    %24 = arith.addf %23, %11 : vector<8x32xf32>
    %cst_22 = arith.constant 0.000000e+00 : f32
    %25 = vector.broadcast %cst_22 : f32 to vector<8x32xf32>
    %26 = arith.maximumf %24, %25 : vector<8x32xf32>
    %c0_23 = arith.constant 0 : index
    %c0_24 = arith.constant 0 : index
    %27 = vector.load %arg10[%c0_23, %c0_24] : memref<32x32xf32, #tpu.memory_space<vmem>>, vector<32x32xf32>
    %cst_25 = arith.constant dense<0.000000e+00> : vector<8x32xf32>
    %28 = tpu.matmul %26, %27, %cst_25 {dimension_numbers = #tpu.dot_dimension_numbers<[1], [0], [0], [1], [0, 0, 1, 1], [], []>} : vector<8x32xf32>, vector<32x32xf32>, vector<8x32xf32> -> vector<8x32xf32>
    %c0_26 = arith.constant 0 : index
    %c0_27 = arith.constant 0 : index
    %29 = vector.load %arg11[%c0_26, %c0_27] : memref<1x32xf32, #tpu.memory_space<vmem>>, vector<1x32xf32>
    %30 = vector.broadcast %29 : vector<1x32xf32> to vector<8x32xf32>
    %31 = arith.addf %28, %30 : vector<8x32xf32>
    %cst_28 = arith.constant 0.000000e+00 : f32
    %32 = vector.broadcast %cst_28 : f32 to vector<8x32xf32>
    %33 = arith.maximumf %31, %32 : vector<8x32xf32>
    %c0_29 = arith.constant 0 : index
    %c0_30 = arith.constant 0 : index
    %34 = vector.load %arg12[%c0_29, %c0_30] : memref<32x32xf32, #tpu.memory_space<vmem>>, vector<32x32xf32>
    %cst_31 = arith.constant dense<0.000000e+00> : vector<8x32xf32>
    %35 = tpu.matmul %33, %34, %cst_31 {dimension_numbers = #tpu.dot_dimension_numbers<[1], [0], [0], [1], [0, 0, 1, 1], [], []>} : vector<8x32xf32>, vector<32x32xf32>, vector<8x32xf32> -> vector<8x32xf32>
    %c0_32 = arith.constant 0 : index
    %c0_33 = arith.constant 0 : index
    %36 = vector.load %arg13[%c0_32, %c0_33] : memref<1x32xf32, #tpu.memory_space<vmem>>, vector<1x32xf32>
    %37 = vector.broadcast %36 : vector<1x32xf32> to vector<8x32xf32>
    %38 = arith.addf %35, %37 : vector<8x32xf32>
    %39 = arith.addf %38, %26 : vector<8x32xf32>
    %cst_34 = arith.constant 0.000000e+00 : f32
    %40 = vector.broadcast %cst_34 : f32 to vector<8x32xf32>
    %41 = arith.maximumf %39, %40 : vector<8x32xf32>
    %c0_35 = arith.constant 0 : index
    %c0_36 = arith.constant 0 : index
    %42 = vector.load %arg14[%c0_35, %c0_36] : memref<32x4xf32, #tpu.memory_space<vmem>>, vector<32x4xf32>
    %cst_37 = arith.constant dense<0.000000e+00> : vector<8x4xf32>
    %43 = tpu.matmul %41, %42, %cst_37 {dimension_numbers = #tpu.dot_dimension_numbers<[1], [0], [0], [1], [0, 0, 1, 1], [], []>} : vector<8x32xf32>, vector<32x4xf32>, vector<8x4xf32> -> vector<8x4xf32>
    %c0_38 = arith.constant 0 : index
    %c0_39 = arith.constant 0 : index
    %44 = vector.load %arg15[%c0_38, %c0_39] : memref<1x4xf32, #tpu.memory_space<vmem>>, vector<1x4xf32>
    %45 = vector.broadcast %44 : vector<1x4xf32> to vector<8x4xf32>
    %46 = arith.addf %43, %45 : vector<8x4xf32>
    %c0_40 = arith.constant 0 : index
    %c0_41 = arith.constant 0 : index
    %47 = vector.load %arg16[%c0_40, %c0_41] : memref<8x4xf32, #tpu.memory_space<vmem>>, vector<8x4xf32>
    tpu.vector_store %arg16[%c0_40, %c0_41], %46 {strides = array<i32>} : memref<8x4xf32, #tpu.memory_space<vmem>>, vector<8x4xf32>,
    return
  }
  func.func @transform_0(%arg0: i32) -> (i32, i32) {
    %c0_i32 = arith.constant 0 : i32
    %c0_i32_0 = arith.constant 0 : i32
    return %arg0, %c0_i32 : i32, i32
  }
  func.func @transform_1(%arg0: i32) -> (i32, i32) {
    %c0_i32 = arith.constant 0 : i32
    %c0_i32_0 = arith.constant 0 : i32
    return %arg0, %c0_i32 : i32, i32
  }
  func.func @transform_2(%arg0: i32) -> (i32, i32) {
    %c0_i32 = arith.constant 0 : i32
    %c0_i32_0 = arith.constant 0 : i32
    %c0_i32_1 = arith.constant 0 : i32
    return %c0_i32, %c0_i32_0 : i32, i32
  }
  func.func @transform_3(%arg0: i32) -> (i32, i32) {
    %c0_i32 = arith.constant 0 : i32
    %c0_i32_0 = arith.constant 0 : i32
    %c0_i32_1 = arith.constant 0 : i32
    return %c0_i32, %c0_i32_0 : i32, i32
  }
  func.func @transform_4(%arg0: i32) -> (i32, i32) {
    %c0_i32 = arith.constant 0 : i32
    %c0_i32_0 = arith.constant 0 : i32
    %c0_i32_1 = arith.constant 0 : i32
    return %c0_i32, %c0_i32_0 : i32, i32
  }
  func.func @transform_5(%arg0: i32) -> (i32, i32) {
    %c0_i32 = arith.constant 0 : i32
    %c0_i32_0 = arith.constant 0 : i32
    %c0_i32_1 = arith.constant 0 : i32
    return %c0_i32, %c0_i32_0 : i32, i32
  }
  func.func @transform_6(%arg0: i32) -> (i32, i32) {
    %c0_i32 = arith.constant 0 : i32
    %c0_i32_0 = arith.constant 0 : i32
    %c0_i32_1 = arith.constant 0 : i32
    return %c0_i32, %c0_i32_0 : i32, i32
  }
  func.func @transform_7(%arg0: i32) -> (i32, i32) {
    %c0_i32 = arith.constant 0 : i32
    %c0_i32_0 = arith.constant 0 : i32
    %c0_i32_1 = arith.constant 0 : i32
    return %c0_i32, %c0_i32_0 : i32, i32
  }
  func.func @transform_8(%arg0: i32) -> (i32, i32) {
    %c0_i32 = arith.constant 0 : i32
    %c0_i32_0 = arith.constant 0 : i32
    %c0_i32_1 = arith.constant 0 : i32
    return %c0_i32, %c0_i32_0 : i32, i32
  }
  func.func @transform_9(%arg0: i32) -> (i32, i32) {
    %c0_i32 = arith.constant 0 : i32
    %c0_i32_0 = arith.constant 0 : i32
    %c0_i32_1 = arith.constant 0 : i32
    return %c0_i32, %c0_i32_0 : i32, i32
  }
  func.func @transform_10(%arg0: i32) -> (i32, i32) {
    %c0_i32 = arith.constant 0 : i32
    %c0_i32_0 = arith.constant 0 : i32
    %c0_i32_1 = arith.constant 0 : i32
    return %c0_i32, %c0_i32_0 : i32, i32
  }
  func.func @transform_11(%arg0: i32) -> (i32, i32) {
    %c0_i32 = arith.constant 0 : i32
    %c0_i32_0 = arith.constant 0 : i32
    %c0_i32_1 = arith.constant 0 : i32
    return %c0_i32, %c0_i32_0 : i32, i32
  }
  func.func @transform_12(%arg0: i32) -> (i32, i32) {
    %c0_i32 = arith.constant 0 : i32
    %c0_i32_0 = arith.constant 0 : i32
    %c0_i32_1 = arith.constant 0 : i32
    return %c0_i32, %c0_i32_0 : i32, i32
  }
  func.func @transform_13(%arg0: i32) -> (i32, i32) {
    %c0_i32 = arith.constant 0 : i32
    %c0_i32_0 = arith.constant 0 : i32
    %c0_i32_1 = arith.constant 0 : i32
    return %c0_i32, %c0_i32_0 : i32, i32
  }
  func.func @transform_14(%arg0: i32) -> (i32, i32) {
    %c0_i32 = arith.constant 0 : i32
    %c0_i32_0 = arith.constant 0 : i32
    %c0_i32_1 = arith.constant 0 : i32
    return %c0_i32, %c0_i32_0 : i32, i32
  }
  func.func @transform_15(%arg0: i32) -> (i32, i32) {
    %c0_i32 = arith.constant 0 : i32
    %c0_i32_0 = arith.constant 0 : i32
    return %arg0, %c0_i32 : i32, i32
  }
}

</mosaic_0001>

<llo_original>
// kernel: aggregate_net_forward.1
$region0: #{aggregate_net_forward.1}
  #allocation0 [shape = 'u32[]', space=smem, size = 0x4, offset = 0x4, fixed_abs, tag = 'smem constant byte address 0x4 - core index']
  #allocation1 [shape = 'u32[144,128]{1,0:T(1,128)}', space=vmem, size = 0x12000, scoped, tag = 'internal scratch']
  %s0 = inlined_call_operand.vmem [shape: f32[8,8], index: 0, kind: input, shape index: {}]
  %s1 = inlined_call_operand.vmem [shape: f32[8,8], index: 1, kind: input, shape index: {}]
  %s2 = inlined_call_operand.vmem [shape: f32[8,32], index: 2, kind: input, shape index: {}]
  %s3 = inlined_call_operand.vmem [shape: f32[8,32], index: 3, kind: input, shape index: {}]
  %s4 = inlined_call_operand.hbm [shape: f32[1,32], index: 4, kind: input, shape index: {}]
  %s5 = inlined_call_operand.vmem [shape: f32[32,32], index: 5, kind: input, shape index: {}]
  %s6 = inlined_call_operand.hbm [shape: f32[1,32], index: 6, kind: input, shape index: {}]
  %s7 = inlined_call_operand.vmem [shape: f32[32,32], index: 7, kind: input, shape index: {}]
  %s8 = inlined_call_operand.hbm [shape: f32[1,32], index: 8, kind: input, shape index: {}]
  %s9 = inlined_call_operand.vmem [shape: f32[32,32], index: 9, kind: input, shape index: {}]
  %s10 = inlined_call_operand.hbm [shape: f32[1,32], index: 10, kind: input, shape index: {}]
  %s11 = inlined_call_operand.vmem [shape: f32[32,32], index: 11, kind: input, shape index: {}]
  %s12 = inlined_call_operand.hbm [shape: f32[1,32], index: 12, kind: input, shape index: {}]
  %s13 = inlined_call_operand.vmem [shape: f32[32,4], index: 13, kind: input, shape index: {}]
  %s14 = inlined_call_operand.hbm [shape: f32[1,4], index: 14, kind: input, shape index: {}]
  %s15 = inlined_call_operand.vmem [shape: f32[8,4], index: 15, kind: output, shape index: {}]
  %s16 = sld [smem:[#allocation0]]
  $region94: #{aggregate_net_forward.1} parent=0
    _
  %s18 = ssub.s32 1, %s16
  %s19 = scalar_select 0, %s18, %s16
  $region1: #{aggregate_net_forward.1} parent=0
    #allocation2 [shape = 'u8[512]{0}', space=vmem, size = 0x400, scoped, tag = 'input window, operand 4, single buffered']
    #allocation3 [shape = 's32[1]{0}', space=sflag, size = 0x4, scoped, tag = 'scoped memory for aggregate_net_forward.1']
    #allocation4 [shape = 'u8[512]{0}', space=vmem, size = 0x400, scoped, tag = 'input window, operand 6, single buffered']
    #allocation5 [shape = 's32[1]{0}', space=sflag, size = 0x4, scoped, tag = 'scoped memory for aggregate_net_forward.1']
    #allocation6 [shape = 'u8[512]{0}', space=vmem, size = 0x400, scoped, tag = 'input window, operand 8, single buffered']
    #allocation7 [shape = 'u8[512]{0}', space=vmem, size = 0x400, scoped, tag = 'input window, operand 10, single buffered']
    #allocation8 [shape = 's32[1]{0}', space=sflag, size = 0x4, scoped, tag = 'scoped memory for aggregate_net_forward.1']
    #allocation9 [shape = 'u8[512]{0}', space=vmem, size = 0x400, scoped, tag = 'input window, operand 12, single buffered']
    #allocation10 [shape = 'u8[512]{0}', space=vmem, size = 0x400, scoped, tag = 'input window, operand 14, single buffered']
    #allocation11 [shape = 's32[1]{0}', space=sflag, size = 0x4, scoped, tag = 'scoped memory for aggregate_net_forward.1']
    %20 = vsyncpa [#allocation3], 0
    %21 = vsyncpa [#allocation5], 0
    %22 = vsyncpa [#allocation8], 0
    %23 = vsyncpa [#allocation11], 0
    // Predicated region
    $region2: #{aggregate_net_forward.1} parent=1 // pred_check
      _
    $region3: #{aggregate_net_forward.1} parent=1 // pred_check_branch
      %25 = sbr.rel (0) target = $region5
    $region4: #{aggregate_net_forward.1} parent=1 // pred_region
      _
    $region5: #{aggregate_net_forward.1} parent=1 // pred_fallthru
      _
    // Predicated region
    $region6: #{aggregate_net_forward.1} parent=1 // pred_check
      _
    $region7: #{aggregate_net_forward.1} parent=1 // pred_check_branch
      %27 = sbr.rel (0) target = $region9
    $region8: #{aggregate_net_forward.1} parent=1 // pred_region
      _
    $region9: #{aggregate_net_forward.1} parent=1 // pred_fallthru
      _
    // Predicated region
    $region10: #{aggregate_net_forward.1} parent=1 // pred_check
      _
    $region11: #{aggregate_net_forward.1} parent=1 // pred_check_branch
      %29 = sbr.rel (0) target = $region13
    $region12: #{aggregate_net_forward.1} parent=1 // pred_region
      _
    $region13: #{aggregate_net_forward.1} parent=1 // pred_fallthru
      _
    // Predicated region
    $region14: #{aggregate_net_forward.1} parent=1 // pred_check
      _
    $region15: #{aggregate_net_forward.1} parent=1 // pred_check_branch
      %31 = sbr.rel (0) target = $region17
    $region16: #{aggregate_net_forward.1} parent=1 // pred_region
      _
    $region17: #{aggregate_net_forward.1} parent=1 // pred_fallthru
      _
    // Predicated region
    $region18: #{aggregate_net_forward.1} parent=1 // pred_check
      _
    $region19: #{aggregate_net_forward.1} parent=1 // pred_check_branch
      %33 = sbr.rel (0) target = $region21
    $region20: #{aggregate_net_forward.1} parent=1 // pred_region
      %s35 = ssub.s32 16, 16
      %36 = vsyncadd [#allocation3], %s35
      %s38 = sshll.u32 [#allocation2], 4
      %s39 = int_to_ptr.vmem [resolvable:$true] %s38
      %41 = dma.hbm_to_vmem [thread:$0]  %s4, 16, %s39, [#allocation3]
    $region21: #{aggregate_net_forward.1} parent=1 // pred_fallthru
      _
    // Predicated region
    $region22: #{aggregate_net_forward.1} parent=1 // pred_check
      _
    $region23: #{aggregate_net_forward.1} parent=1 // pred_check_branch
      %43 = sbr.rel (0) target = $region25
    $region24: #{aggregate_net_forward.1} parent=1 // pred_region
      _
    $region25: #{aggregate_net_forward.1} parent=1 // pred_fallthru
      _
    // Predicated region
    $region26: #{aggregate_net_forward.1} parent=1 // pred_check
      _
    $region27: #{aggregate_net_forward.1} parent=1 // pred_check_branch
      %45 = sbr.rel (0) target = $region29
    $region28: #{aggregate_net_forward.1} parent=1 // pred_region
      %s47 = ssub.s32 16, 16
      %48 = vsyncadd [#allocation5], %s47
      %s50 = sshll.u32 [#allocation4], 4
      %s51 = int_to_ptr.vmem [resolvable:$true] %s50
      %53 = dma.hbm_to_vmem [thread:$0]  %s6, 16, %s51, [#allocation5]
    $region29: #{aggregate_net_forward.1} parent=1 // pred_fallthru
      _
    // Predicated region
    $region30: #{aggregate_net_forward.1} parent=1 // pred_check
      _
    $region31: #{aggregate_net_forward.1} parent=1 // pred_check_branch
      %55 = sbr.rel (0) target = $region33
    $region32: #{aggregate_net_forward.1} parent=1 // pred_region
      _
    $region33: #{aggregate_net_forward.1} parent=1 // pred_fallthru
      _
    // Predicated region
    $region34: #{aggregate_net_forward.1} parent=1 // pred_check
      _
    $region35: #{aggregate_net_forward.1} parent=1 // pred_check_branch
      %57 = sbr.rel (0) target = $region37
    $region36: #{aggregate_net_forward.1} parent=1 // pred_region
      %s59 = ssub.s32 16, 16
      %60 = vsyncadd [#allocation5], %s59
      %s62 = sshll.u32 [#allocation6], 4
      %s63 = int_to_ptr.vmem [resolvable:$true] %s62
      %65 = dma.hbm_to_vmem [thread:$0]  %s8, 16, %s63, [#allocation5]
    $region37: #{aggregate_net_forward.1} parent=1 // pred_fallthru
      _
    // Predicated region
    $region38: #{aggregate_net_forward.1} parent=1 // pred_check
      _
    $region39: #{aggregate_net_forward.1} parent=1 // pred_check_branch
      %67 = sbr.rel (0) target = $region41
    $region40: #{aggregate_net_forward.1} parent=1 // pred_region
      _
    $region41: #{aggregate_net_forward.1} parent=1 // pred_fallthru
      _
    // Predicated region
    $region42: #{aggregate_net_forward.1} parent=1 // pred_check
      _
    $region43: #{aggregate_net_forward.1} parent=1 // pred_check_branch
      %69 = sbr.rel (0) target = $region45
    $region44: #{aggregate_net_forward.1} parent=1 // pred_region
      %s71 = ssub.s32 16, 16
      %72 = vsyncadd [#allocation8], %s71
      %s74 = sshll.u32 [#allocation7], 4
      %s75 = int_to_ptr.vmem [resolvable:$true] %s74
      %77 = dma.hbm_to_vmem [thread:$0]  %s10, 16, %s75, [#allocation8]
    $region45: #{aggregate_net_forward.1} parent=1 // pred_fallthru
      _
    // Predicated region
    $region46: #{aggregate_net_forward.1} parent=1 // pred_check
      _
    $region47: #{aggregate_net_forward.1} parent=1 // pred_check_branch
      %79 = sbr.rel (0) target = $region49
    $region48: #{aggregate_net_forward.1} parent=1 // pred_region
      _
    $region49: #{aggregate_net_forward.1} parent=1 // pred_fallthru
      _
    // Predicated region
    $region50: #{aggregate_net_forward.1} parent=1 // pred_check
      _
    $region51: #{aggregate_net_forward.1} parent=1 // pred_check_branch
      %81 = sbr.rel (0) target = $region53
    $region52: #{aggregate_net_forward.1} parent=1 // pred_region
      %s83 = ssub.s32 16, 16
      %84 = vsyncadd [#allocation8], %s83
      %s86 = sshll.u32 [#allocation9], 4
      %s87 = int_to_ptr.vmem [resolvable:$true] %s86
      %89 = dma.hbm_to_vmem [thread:$0]  %s12, 16, %s87, [#allocation8]
    $region53: #{aggregate_net_forward.1} parent=1 // pred_fallthru
      _
    // Predicated region
    $region54: #{aggregate_net_forward.1} parent=1 // pred_check
      _
    $region55: #{aggregate_net_forward.1} parent=1 // pred_check_branch
      %91 = sbr.rel (0) target = $region57
    $region56: #{aggregate_net_forward.1} parent=1 // pred_region
      _
    $region57: #{aggregate_net_forward.1} parent=1 // pred_fallthru
      _
    // Predicated region
    $region58: #{aggregate_net_forward.1} parent=1 // pred_check
      _
    $region59: #{aggregate_net_forward.1} parent=1 // pred_check_branch
      %93 = sbr.rel (0) target = $region61
    $region60: #{aggregate_net_forward.1} parent=1 // pred_region
      %s95 = ssub.s32 16, 16
      %96 = vsyncadd [#allocation11], %s95
      %s98 = sshll.u32 [#allocation10], 4
      %s99 = int_to_ptr.vmem [resolvable:$true] %s98
      %101 = dma.hbm_to_vmem [thread:$0]  %s14, 16, %s99, [#allocation11]
    $region61: #{aggregate_net_forward.1} parent=1 // pred_fallthru
      _
    // Predicated region
    $region62: #{aggregate_net_forward.1} parent=1 // pred_check
      _
    $region63: #{aggregate_net_forward.1} parent=1 // pred_check_branch
      %103 = sbr.rel (0) target = $region65
    $region64: #{aggregate_net_forward.1} parent=1 // pred_region
      %104 = dma.done [#allocation3], 16
    $region65: #{aggregate_net_forward.1} parent=1 // pred_fallthru
      _
    // Predicated region
    $region66: #{aggregate_net_forward.1} parent=1 // pred_check
      _
    $region67: #{aggregate_net_forward.1} parent=1 // pred_check_branch
      %106 = sbr.rel (0) target = $region69
    $region68: #{aggregate_net_forward.1} parent=1 // pred_region
      %107 = dma.done [#allocation5], 16
    $region69: #{aggregate_net_forward.1} parent=1 // pred_fallthru
      _
    // Predicated region
    $region70: #{aggregate_net_forward.1} parent=1 // pred_check
      _
    $region71: #{aggregate_net_forward.1} parent=1 // pred_check_branch
      %109 = sbr.rel (0) target = $region73
    $region72: #{aggregate_net_forward.1} parent=1 // pred_region
      %110 = dma.done [#allocation5], 16
    $region73: #{aggregate_net_forward.1} parent=1 // pred_fallthru
      _
    // Predicated region
    $region74: #{aggregate_net_forward.1} parent=1 // pred_check
      _
    $region75: #{aggregate_net_forward.1} parent=1 // pred_check_branch
      %112 = sbr.rel (0) target = $region77
    $region76: #{aggregate_net_forward.1} parent=1 // pred_region
      %113 = dma.done [#allocation8], 16
    $region77: #{aggregate_net_forward.1} parent=1 // pred_fallthru
      _
    // Predicated region
    $region78: #{aggregate_net_forward.1} parent=1 // pred_check
      _
    $region79: #{aggregate_net_forward.1} parent=1 // pred_check_branch
      %115 = sbr.rel (0) target = $region81
    $region80: #{aggregate_net_forward.1} parent=1 // pred_region
      %116 = dma.done [#allocation8], 16
    $region81: #{aggregate_net_forward.1} parent=1 // pred_fallthru
      _
    // Predicated region
    $region82: #{aggregate_net_forward.1} parent=1 // pred_check
      _
    $region83: #{aggregate_net_forward.1} parent=1 // pred_check_branch
      %118 = sbr.rel (0) target = $region85
    $region84: #{aggregate_net_forward.1} parent=1 // pred_region
      %119 = dma.done [#allocation11], 16
    $region85: #{aggregate_net_forward.1} parent=1 // pred_fallthru
      _
    %v120 = vld [vmem:[%s0] sm:$0xff]
    %v121 = vld [vmem:[%s2] sm:$0xff]
    %v122 = vld [vmem:[%s1] sm:$0xff]
    %v123 = vld [vmem:[%s3] sm:$0xff]
    %vm124 = vcmask 64512
    %v126 = vsel %vm124, %v122, 0
    %128 = vmatprep.subr.mxu0 0.0
    %129 = vmatpush1.msra.mxu0 0.0
    %130 = vmatprep.subr.mxu0 0.0
    %131 = vmatpush1.msra.mxu0 0.0
    %132 = vmatprep.subr.mxu0 0.0
    %133 = vmatpush1.msra.mxu0 0.0
    %134 = vmatprep.subr.mxu0 0.0
    %135 = vmatpush1.msra.mxu0 0.0
    %136 = vmatprep.subr.mxu0 0.0
    %137 = vmatpush1.msra.mxu0 0.0
    %138 = vmatprep.subr.mxu0 0.0
    %139 = vmatpush1.msra.mxu0 0.0
    %140 = vmatprep.subr.mxu0 0.0
    %141 = vmatpush1.msra.mxu0 0.0
    %142 = vmatprep.subr.mxu0 0.0
    %143 = vmatpush1.msra.mxu0 0.0
    %144 = vmatprep.subr.mxu0 0.0
    %145 = vmatpush1.msra.mxu0 0.0
    %146 = vmatprep.subr.mxu0 0.0
    %147 = vmatpush1.msra.mxu0 0.0
    %148 = vmatprep.subr.mxu0 0.0
    %149 = vmatpush1.msra.mxu0 0.0
    %150 = vmatprep.subr.mxu0 0.0
    %151 = vmatpush1.msra.mxu0 0.0
    %152 = vmatprep.subr.mxu0 0.0
    %153 = vmatpush1.msra.mxu0 0.0
    %154 = vmatprep.subr.mxu0 0.0
    %155 = vmatpush1.msra.mxu0 0.0
    %156 = vmatprep.subr.mxu0 0.0
    %157 = vmatpush1.msra.mxu0 0.0
    %158 = vmatprep.subr.mxu0 0.0
    %159 = vmatpush1.msra.mxu0 %v123
    %160 = vmatprep.subr.mxu0 0.0
    %161 = vmatpush2.msra.mxu0 0.0
    %162 = vmatprep.subr.mxu0 0.0
    %163 = vmatpush2.msra.mxu0 0.0
    %164 = vmatprep.subr.mxu0 0.0
    %165 = vmatpush2.msra.mxu0 0.0
    %166 = vmatprep.subr.mxu0 0.0
    %167 = vmatpush2.msra.mxu0 0.0
    %168 = vmatprep.subr.mxu0 0.0
    %169 = vmatpush2.msra.mxu0 0.0
    %170 = vmatprep.subr.mxu0 0.0
    %171 = vmatpush2.msra.mxu0 0.0
    %172 = vmatprep.subr.mxu0 0.0
    %173 = vmatpush2.msra.mxu0 0.0
    %174 = vmatprep.subr.mxu0 0.0
    %175 = vmatpush2.msra.mxu0 0.0
    %176 = vmatprep.subr.mxu0 0.0
    %177 = vmatpush2.msra.mxu0 0.0
    %178 = vmatprep.subr.mxu0 0.0
    %179 = vmatpush2.msra.mxu0 0.0
    %180 = vmatprep.subr.mxu0 0.0
    %181 = vmatpush2.msra.mxu0 0.0
    %182 = vmatprep.subr.mxu0 0.0
    %183 = vmatpush2.msra.mxu0 0.0
    %184 = vmatprep.subr.mxu0 0.0
    %185 = vmatpush2.msra.mxu0 0.0
    %186 = vmatprep.subr.mxu0 0.0
    %187 = vmatpush2.msra.mxu0 0.0
    %188 = vmatprep.subr.mxu0 0.0
    %189 = vmatpush2.msra.mxu0 0.0
    %190 = vmatprep.subr.mxu0 0.0
    %191 = vmatpush2.msra.mxu0 0.0
    %192 = vmatprep.mubr.f32.mxu0 0.0
    %193 = vmatmul.mubr.f32.gmra.mxu0 %v126
    %v194 = vpop.f32.mrf.mxu0
    %v195 = vadd.f32 0.0, %v194
    %v196 = vpop.f32.mrf.mxu0
    %197 = vdwg.mxu0
    %v199 = vsel %vm124, %v120, 0
    %201 = vmatprep.subr.mxu0 0.0
    %202 = vmatpush1.msra.mxu0 0.0
    %203 = vmatprep.subr.mxu0 0.0
    %204 = vmatpush1.msra.mxu0 0.0
    %205 = vmatprep.subr.mxu0 0.0
    %206 = vmatpush1.msra.mxu0 0.0
    %207 = vmatprep.subr.mxu0 0.0
    %208 = vmatpush1.msra.mxu0 0.0
    %209 = vmatprep.subr.mxu0 0.0
    %210 = vmatpush1.msra.mxu0 0.0
    %211 = vmatprep.subr.mxu0 0.0
    %212 = vmatpush1.msra.mxu0 0.0
    %213 = vmatprep.subr.mxu0 0.0
    %214 = vmatpush1.msra.mxu0 0.0
    %215 = vmatprep.subr.mxu0 0.0
    %216 = vmatpush1.msra.mxu0 0.0
    %217 = vmatprep.subr.mxu0 0.0
    %218 = vmatpush1.msra.mxu0 0.0
    %219 = vmatprep.subr.mxu0 0.0
    %220 = vmatpush1.msra.mxu0 0.0
    %221 = vmatprep.subr.mxu0 0.0
    %222 = vmatpush1.msra.mxu0 0.0
    %223 = vmatprep.subr.mxu0 0.0
    %224 = vmatpush1.msra.mxu0 0.0
    %225 = vmatprep.subr.mxu0 0.0
    %226 = vmatpush1.msra.mxu0 0.0
    %227 = vmatprep.subr.mxu0 0.0
    %228 = vmatpush1.msra.mxu0 0.0
    %229 = vmatprep.subr.mxu0 0.0
    %230 = vmatpush1.msra.mxu0 0.0
    %231 = vmatprep.subr.mxu0 0.0
    %232 = vmatpush1.msra.mxu0 %v121
    %233 = vmatprep.subr.mxu0 0.0
    %234 = vmatpush2.msra.mxu0 0.0
    %235 = vmatprep.subr.mxu0 0.0
    %236 = vmatpush2.msra.mxu0 0.0
    %237 = vmatprep.subr.mxu0 0.0
    %238 = vmatpush2.msra.mxu0 0.0
    %239 = vmatprep.subr.mxu0 0.0
    %240 = vmatpush2.msra.mxu0 0.0
    %241 = vmatprep.subr.mxu0 0.0
    %242 = vmatpush2.msra.mxu0 0.0
    %243 = vmatprep.subr.mxu0 0.0
    %244 = vmatpush2.msra.mxu0 0.0
    %245 = vmatprep.subr.mxu0 0.0
    %246 = vmatpush2.msra.mxu0 0.0
    %247 = vmatprep.subr.mxu0 0.0
    %248 = vmatpush2.msra.mxu0 0.0
    %249 = vmatprep.subr.mxu0 0.0
    %250 = vmatpush2.msra.mxu0 0.0
    %251 = vmatprep.subr.mxu0 0.0
    %252 = vmatpush2.msra.mxu0 0.0
    %253 = vmatprep.subr.mxu0 0.0
    %254 = vmatpush2.msra.mxu0 0.0
    %255 = vmatprep.subr.mxu0 0.0
    %256 = vmatpush2.msra.mxu0 0.0
    %257 = vmatprep.subr.mxu0 0.0
    %258 = vmatpush2.msra.mxu0 0.0
    %259 = vmatprep.subr.mxu0 0.0
    %260 = vmatpush2.msra.mxu0 0.0
    %261 = vmatprep.subr.mxu0 0.0
    %262 = vmatpush2.msra.mxu0 0.0
    %263 = vmatprep.subr.mxu0 0.0
    %264 = vmatpush2.msra.mxu0 0.0
    %265 = vmatprep.mubr.f32.mxu0 0.0
    %266 = vmatmul.mubr.f32.gmra.mxu0 %v199
    %v267 = vpop.f32.mrf.mxu0
    %v268 = vadd.f32 %v195, %v267
    %v269 = vpop.f32.mrf.mxu0
    %270 = vdwg.mxu0
    %v271 = vld [vmem:[#allocation2] sm:$0x1]
    %v273 = vlaneseq
    %v274 = vshrl.u32 %v273, 7
    %v275 = vsub.s32 0, %v274
    %v276 = vrot.slane %v271, %v275
    %v278 = vadd.f32 %v268, %v276
    %v279 = vmax.f32 %v278, 0.0
    %v280 = vld [vmem:[%s5] sm:$0xff]
    %v281 = vld [vmem:[%s5 + $0x8] sm:$0xff]
    %v282 = vld [vmem:[%s5 + $0x10] sm:$0xff]
    %v283 = vld [vmem:[%s5 + $0x18] sm:$0xff]
    %v284 = vld [vmem:[#allocation4] sm:$0x1]
    %v286 = vlaneseq
    %v287 = vshrl.u32 %v286, 7
    %v288 = vsub.s32 0, %v287
    %v289 = vrot.slane %v284, %v288
    %vm291 = vcmask 261120
    %v293 = vsel %vm291, %v279, 0
    %295 = vmatprep.subr.mxu0 0.0
    %296 = vmatpush1.msra.mxu0 0.0
    %297 = vmatprep.subr.mxu0 0.0
    %298 = vmatpush1.msra.mxu0 0.0
    %299 = vmatprep.subr.mxu0 0.0
    %300 = vmatpush1.msra.mxu0 0.0
    %301 = vmatprep.subr.mxu0 0.0
    %302 = vmatpush1.msra.mxu0 0.0
    %303 = vmatprep.subr.mxu0 0.0
    %304 = vmatpush1.msra.mxu0 0.0
    %305 = vmatprep.subr.mxu0 0.0
    %306 = vmatpush1.msra.mxu0 0.0
    %307 = vmatprep.subr.mxu0 0.0
    %308 = vmatpush1.msra.mxu0 0.0
    %309 = vmatprep.subr.mxu0 0.0
    %310 = vmatpush1.msra.mxu0 0.0
    %311 = vmatprep.subr.mxu0 0.0
    %312 = vmatpush1.msra.mxu0 0.0
    %313 = vmatprep.subr.mxu0 0.0
    %314 = vmatpush1.msra.mxu0 0.0
    %315 = vmatprep.subr.mxu0 0.0
    %316 = vmatpush1.msra.mxu0 0.0
    %317 = vmatprep.subr.mxu0 0.0
    %318 = vmatpush1.msra.mxu0 0.0
    %319 = vmatprep.subr.mxu0 0.0
    %320 = vmatpush1.msra.mxu0 %v283
    %321 = vmatprep.subr.mxu0 0.0
    %322 = vmatpush1.msra.mxu0 %v282
    %323 = vmatprep.subr.mxu0 0.0
    %324 = vmatpush1.msra.mxu0 %v281
    %325 = vmatprep.subr.mxu0 0.0
    %326 = vmatpush1.msra.mxu0 %v280
    %327 = vmatprep.subr.mxu0 0.0
    %328 = vmatpush2.msra.mxu0 0.0
    %329 = vmatprep.subr.mxu0 0.0
    %330 = vmatpush2.msra.mxu0 0.0
    %331 = vmatprep.subr.mxu0 0.0
    %332 = vmatpush2.msra.mxu0 0.0
    %333 = vmatprep.subr.mxu0 0.0
    %334 = vmatpush2.msra.mxu0 0.0
    %335 = vmatprep.subr.mxu0 0.0
    %336 = vmatpush2.msra.mxu0 0.0
    %337 = vmatprep.subr.mxu0 0.0
    %338 = vmatpush2.msra.mxu0 0.0
    %339 = vmatprep.subr.mxu0 0.0
    %340 = vmatpush2.msra.mxu0 0.0
    %341 = vmatprep.subr.mxu0 0.0
    %342 = vmatpush2.msra.mxu0 0.0
    %343 = vmatprep.subr.mxu0 0.0
    %344 = vmatpush2.msra.mxu0 0.0
    %345 = vmatprep.subr.mxu0 0.0
    %346 = vmatpush2.msra.mxu0 0.0
    %347 = vmatprep.subr.mxu0 0.0
    %348 = vmatpush2.msra.mxu0 0.0
    %349 = vmatprep.subr.mxu0 0.0
    %350 = vmatpush2.msra.mxu0 0.0
    %351 = vmatprep.subr.mxu0 0.0
    %352 = vmatpush2.msra.mxu0 0.0
    %353 = vmatprep.subr.mxu0 0.0
    %354 = vmatpush2.msra.mxu0 0.0
    %355 = vmatprep.subr.mxu0 0.0
    %356 = vmatpush2.msra.mxu0 0.0
    %357 = vmatprep.subr.mxu0 0.0
    %358 = vmatpush2.msra.mxu0 0.0
    %359 = vmatprep.mubr.f32.mxu0 0.0
    %360 = vmatmul.mubr.f32.gmra.mxu0 %v293
    %v361 = vpop.f32.mrf.mxu0
    %v362 = vadd.f32 %v289, %v361
    %v363 = vpop.f32.mrf.mxu0
    %364 = vdwg.mxu0
    %v365 = vmax.f32 %v362, 0.0
    %v366 = vld [vmem:[%s7] sm:$0xff]
    %v367 = vld [vmem:[%s7 + $0x8] sm:$0xff]
    %v368 = vld [vmem:[%s7 + $0x10] sm:$0xff]
    %v369 = vld [vmem:[%s7 + $0x18] sm:$0xff]
    %v370 = vld [vmem:[#allocation6] sm:$0x1]
    %v372 = vlaneseq
    %v373 = vshrl.u32 %v372, 7
    %v374 = vsub.s32 0, %v373
    %v375 = vrot.slane %v370, %v374
    %v378 = vsel %vm291, %v365, 0
    %380 = vmatprep.subr.mxu0 0.0
    %381 = vmatpush1.msra.mxu0 0.0
    %382 = vmatprep.subr.mxu0 0.0
    %383 = vmatpush1.msra.mxu0 0.0
    %384 = vmatprep.subr.mxu0 0.0
    %385 = vmatpush1.msra.mxu0 0.0
    %386 = vmatprep.subr.mxu0 0.0
    %387 = vmatpush1.msra.mxu0 0.0
    %388 = vmatprep.subr.mxu0 0.0
    %389 = vmatpush1.msra.mxu0 0.0
    %390 = vmatprep.subr.mxu0 0.0
    %391 = vmatpush1.msra.mxu0 0.0
    %392 = vmatprep.subr.mxu0 0.0
    %393 = vmatpush1.msra.mxu0 0.0
    %394 = vmatprep.subr.mxu0 0.0
    %395 = vmatpush1.msra.mxu0 0.0
    %396 = vmatprep.subr.mxu0 0.0
    %397 = vmatpush1.msra.mxu0 0.0
    %398 = vmatprep.subr.mxu0 0.0
    %399 = vmatpush1.msra.mxu0 0.0
    %400 = vmatprep.subr.mxu0 0.0
    %401 = vmatpush1.msra.mxu0 0.0
    %402 = vmatprep.subr.mxu0 0.0
    %403 = vmatpush1.msra.mxu0 0.0
    %404 = vmatprep.subr.mxu0 0.0
    %405 = vmatpush1.msra.mxu0 %v369
    %406 = vmatprep.subr.mxu0 0.0
    %407 = vmatpush1.msra.mxu0 %v368
    %408 = vmatprep.subr.mxu0 0.0
    %409 = vmatpush1.msra.mxu0 %v367
    %410 = vmatprep.subr.mxu0 0.0
    %411 = vmatpush1.msra.mxu0 %v366
    %412 = vmatprep.subr.mxu0 0.0
    %413 = vmatpush2.msra.mxu0 0.0
    %414 = vmatprep.subr.mxu0 0.0
    %415 = vmatpush2.msra.mxu0 0.0
    %416 = vmatprep.subr.mxu0 0.0
    %417 = vmatpush2.msra.mxu0 0.0
    %418 = vmatprep.subr.mxu0 0.0
    %419 = vmatpush2.msra.mxu0 0.0
    %420 = vmatprep.subr.mxu0 0.0
    %421 = vmatpush2.msra.mxu0 0.0
    %422 = vmatprep.subr.mxu0 0.0
    %423 = vmatpush2.msra.mxu0 0.0
    %424 = vmatprep.subr.mxu0 0.0
    %425 = vmatpush2.msra.mxu0 0.0
    %426 = vmatprep.subr.mxu0 0.0
    %427 = vmatpush2.msra.mxu0 0.0
    %428 = vmatprep.subr.mxu0 0.0
    %429 = vmatpush2.msra.mxu0 0.0
    %430 = vmatprep.subr.mxu0 0.0
    %431 = vmatpush2.msra.mxu0 0.0
    %432 = vmatprep.subr.mxu0 0.0
    %433 = vmatpush2.msra.mxu0 0.0
    %434 = vmatprep.subr.mxu0 0.0
    %435 = vmatpush2.msra.mxu0 0.0
    %436 = vmatprep.subr.mxu0 0.0
    %437 = vmatpush2.msra.mxu0 0.0
    %438 = vmatprep.subr.mxu0 0.0
    %439 = vmatpush2.msra.mxu0 0.0
    %440 = vmatprep.subr.mxu0 0.0
    %441 = vmatpush2.msra.mxu0 0.0
    %442 = vmatprep.subr.mxu0 0.0
    %443 = vmatpush2.msra.mxu0 0.0
    %444 = vmatprep.mubr.f32.mxu0 0.0
    %445 = vmatmul.mubr.f32.gmra.mxu0 %v378
    %v446 = vpop.f32.mrf.mxu0
    %v447 = vadd.f32 %v375, %v446
    %v448 = vpop.f32.mrf.mxu0
    %449 = vdwg.mxu0
    %v450 = vadd.f32 %v447, %v279
    %v451 = vmax.f32 %v450, 0.0
    %v452 = vld [vmem:[%s9] sm:$0xff]
    %v453 = vld [vmem:[%s9 + $0x8] sm:$0xff]
    %v454 = vld [vmem:[%s9 + $0x10] sm:$0xff]
    %v455 = vld [vmem:[%s9 + $0x18] sm:$0xff]
    %v456 = vld [vmem:[#allocation7] sm:$0x1]
    %v458 = vlaneseq
    %v459 = vshrl.u32 %v458, 7
    %v460 = vsub.s32 0, %v459
    %v461 = vrot.slane %v456, %v460
    %v464 = vsel %vm291, %v451, 0
    %466 = vmatprep.subr.mxu0 0.0
    %467 = vmatpush1.msra.mxu0 0.0
    %468 = vmatprep.subr.mxu0 0.0
    %469 = vmatpush1.msra.mxu0 0.0
    %470 = vmatprep.subr.mxu0 0.0
    %471 = vmatpush1.msra.mxu0 0.0
    %472 = vmatprep.subr.mxu0 0.0
    %473 = vmatpush1.msra.mxu0 0.0
    %474 = vmatprep.subr.mxu0 0.0
    %475 = vmatpush1.msra.mxu0 0.0
    %476 = vmatprep.subr.mxu0 0.0
    %477 = vmatpush1.msra.mxu0 0.0
    %478 = vmatprep.subr.mxu0 0.0
    %479 = vmatpush1.msra.mxu0 0.0
    %480 = vmatprep.subr.mxu0 0.0
    %481 = vmatpush1.msra.mxu0 0.0
    %482 = vmatprep.subr.mxu0 0.0
    %483 = vmatpush1.msra.mxu0 0.0
    %484 = vmatprep.subr.mxu0 0.0
    %485 = vmatpush1.msra.mxu0 0.0
    %486 = vmatprep.subr.mxu0 0.0
    %487 = vmatpush1.msra.mxu0 0.0
    %488 = vmatprep.subr.mxu0 0.0
    %489 = vmatpush1.msra.mxu0 0.0
    %490 = vmatprep.subr.mxu0 0.0
    %491 = vmatpush1.msra.mxu0 %v455
    %492 = vmatprep.subr.mxu0 0.0
    %493 = vmatpush1.msra.mxu0 %v454
    %494 = vmatprep.subr.mxu0 0.0
    %495 = vmatpush1.msra.mxu0 %v453
    %496 = vmatprep.subr.mxu0 0.0
    %497 = vmatpush1.msra.mxu0 %v452
    %498 = vmatprep.subr.mxu0 0.0
    %499 = vmatpush2.msra.mxu0 0.0
    %500 = vmatprep.subr.mxu0 0.0
    %501 = vmatpush2.msra.mxu0 0.0
    %502 = vmatprep.subr.mxu0 0.0
    %503 = vmatpush2.msra.mxu0 0.0
    %504 = vmatprep.subr.mxu0 0.0
    %505 = vmatpush2.msra.mxu0 0.0
    %506 = vmatprep.subr.mxu0 0.0
    %507 = vmatpush2.msra.mxu0 0.0
    %508 = vmatprep.subr.mxu0 0.0
    %509 = vmatpush2.msra.mxu0 0.0
    %510 = vmatprep.subr.mxu0 0.0
    %511 = vmatpush2.msra.mxu0 0.0
    %512 = vmatprep.subr.mxu0 0.0
    %513 = vmatpush2.msra.mxu0 0.0
    %514 = vmatprep.subr.mxu0 0.0
    %515 = vmatpush2.msra.mxu0 0.0
    %516 = vmatprep.subr.mxu0 0.0
    %517 = vmatpush2.msra.mxu0 0.0
    %518 = vmatprep.subr.mxu0 0.0
    %519 = vmatpush2.msra.mxu0 0.0
    %520 = vmatprep.subr.mxu0 0.0
    %521 = vmatpush2.msra.mxu0 0.0
    %522 = vmatprep.subr.mxu0 0.0
    %523 = vmatpush2.msra.mxu0 0.0
    %524 = vmatprep.subr.mxu0 0.0
    %525 = vmatpush2.msra.mxu0 0.0
    %526 = vmatprep.subr.mxu0 0.0
    %527 = vmatpush2.msra.mxu0 0.0
    %528 = vmatprep.subr.mxu0 0.0
    %529 = vmatpush2.msra.mxu0 0.0
    %530 = vmatprep.mubr.f32.mxu0 0.0
    %531 = vmatmul.mubr.f32.gmra.mxu0 %v464
    %v532 = vpop.f32.mrf.mxu0
    %v533 = vadd.f32 %v461, %v532
    %v534 = vpop.f32.mrf.mxu0
    %535 = vdwg.mxu0
    %v536 = vmax.f32 %v533, 0.0
    %v537 = vld [vmem:[%s11] sm:$0xff]
    %v538 = vld [vmem:[%s11 + $0x8] sm:$0xff]
    %v539 = vld [vmem:[%s11 + $0x10] sm:$0xff]
    %v540 = vld [vmem:[%s11 + $0x18] sm:$0xff]
    %v541 = vld [vmem:[#allocation9] sm:$0x1]
    %v543 = vlaneseq
    %v544 = vshrl.u32 %v543, 7
    %v545 = vsub.s32 0, %v544
    %v546 = vrot.slane %v541, %v545
    %v549 = vsel %vm291, %v536, 0
    %551 = vmatprep.subr.mxu0 0.0
    %552 = vmatpush1.msra.mxu0 0.0
    %553 = vmatprep.subr.mxu0 0.0
    %554 = vmatpush1.msra.mxu0 0.0
    %555 = vmatprep.subr.mxu0 0.0
    %556 = vmatpush1.msra.mxu0 0.0
    %557 = vmatprep.subr.mxu0 0.0
    %558 = vmatpush1.msra.mxu0 0.0
    %559 = vmatprep.subr.mxu0 0.0
    %560 = vmatpush1.msra.mxu0 0.0
    %561 = vmatprep.subr.mxu0 0.0
    %562 = vmatpush1.msra.mxu0 0.0
    %563 = vmatprep.subr.mxu0 0.0
    %564 = vmatpush1.msra.mxu0 0.0
    %565 = vmatprep.subr.mxu0 0.0
    %566 = vmatpush1.msra.mxu0 0.0
    %567 = vmatprep.subr.mxu0 0.0
    %568 = vmatpush1.msra.mxu0 0.0
    %569 = vmatprep.subr.mxu0 0.0
    %570 = vmatpush1.msra.mxu0 0.0
    %571 = vmatprep.subr.mxu0 0.0
    %572 = vmatpush1.msra.mxu0 0.0
    %573 = vmatprep.subr.mxu0 0.0
    %574 = vmatpush1.msra.mxu0 0.0
    %575 = vmatprep.subr.mxu0 0.0
    %576 = vmatpush1.msra.mxu0 %v540
    %577 = vmatprep.subr.mxu0 0.0
    %578 = vmatpush1.msra.mxu0 %v539
    %579 = vmatprep.subr.mxu0 0.0
    %580 = vmatpush1.msra.mxu0 %v538
    %581 = vmatprep.subr.mxu0 0.0
    %582 = vmatpush1.msra.mxu0 %v537
    %583 = vmatprep.subr.mxu0 0.0
    %584 = vmatpush2.msra.mxu0 0.0
    %585 = vmatprep.subr.mxu0 0.0
    %586 = vmatpush2.msra.mxu0 0.0
    %587 = vmatprep.subr.mxu0 0.0
    %588 = vmatpush2.msra.mxu0 0.0
    %589 = vmatprep.subr.mxu0 0.0
    %590 = vmatpush2.msra.mxu0 0.0
    %591 = vmatprep.subr.mxu0 0.0
    %592 = vmatpush2.msra.mxu0 0.0
    %593 = vmatprep.subr.mxu0 0.0
    %594 = vmatpush2.msra.mxu0 0.0
    %595 = vmatprep.subr.mxu0 0.0
    %596 = vmatpush2.msra.mxu0 0.0
    %597 = vmatprep.subr.mxu0 0.0
    %598 = vmatpush2.msra.mxu0 0.0
    %599 = vmatprep.subr.mxu0 0.0
    %600 = vmatpush2.msra.mxu0 0.0
    %601 = vmatprep.subr.mxu0 0.0
    %602 = vmatpush2.msra.mxu0 0.0
    %603 = vmatprep.subr.mxu0 0.0
    %604 = vmatpush2.msra.mxu0 0.0
    %605 = vmatprep.subr.mxu0 0.0
    %606 = vmatpush2.msra.mxu0 0.0
    %607 = vmatprep.subr.mxu0 0.0
    %608 = vmatpush2.msra.mxu0 0.0
    %609 = vmatprep.subr.mxu0 0.0
    %610 = vmatpush2.msra.mxu0 0.0
    %611 = vmatprep.subr.mxu0 0.0
    %612 = vmatpush2.msra.mxu0 0.0
    %613 = vmatprep.subr.mxu0 0.0
    %614 = vmatpush2.msra.mxu0 0.0
    %615 = vmatprep.mubr.f32.mxu0 0.0
    %616 = vmatmul.mubr.f32.gmra.mxu0 %v549
    %v617 = vpop.f32.mrf.mxu0
    %v618 = vadd.f32 %v546, %v617
    %v619 = vpop.f32.mrf.mxu0
    %620 = vdwg.mxu0
    %v621 = vadd.f32 %v618, %v451
    %v622 = vmax.f32 %v621, 0.0
    %v623 = vld [vmem:[%s13] sm:$0xff]
    %v624 = vld [vmem:[%s13 + $0x8] sm:$0xff]
    %v625 = vld [vmem:[%s13 + $0x10] sm:$0xff]
    %v626 = vld [vmem:[%s13 + $0x18] sm:$0xff]
    %v627 = vld [vmem:[#allocation10] sm:$0x1]
    %v629 = vlaneseq
    %v630 = vshrl.u32 %v629, 7
    %v631 = vsub.s32 0, %v630
    %v632 = vrot.slane %v627, %v631
    %v635 = vsel %vm291, %v622, 0
    %637 = vmatprep.subr.mxu0 0.0
    %638 = vmatpush1.msra.mxu0 0.0
    %639 = vmatprep.subr.mxu0 0.0
    %640 = vmatpush1.msra.mxu0 0.0
    %641 = vmatprep.subr.mxu0 0.0
    %642 = vmatpush1.msra.mxu0 0.0
    %643 = vmatprep.subr.mxu0 0.0
    %644 = vmatpush1.msra.mxu0 0.0
    %645 = vmatprep.subr.mxu0 0.0
    %646 = vmatpush1.msra.mxu0 0.0
    %647 = vmatprep.subr.mxu0 0.0
    %648 = vmatpush1.msra.mxu0 0.0
    %649 = vmatprep.subr.mxu0 0.0
    %650 = vmatpush1.msra.mxu0 0.0
    %651 = vmatprep.subr.mxu0 0.0
    %652 = vmatpush1.msra.mxu0 0.0
    %653 = vmatprep.subr.mxu0 0.0
    %654 = vmatpush1.msra.mxu0 0.0
    %655 = vmatprep.subr.mxu0 0.0
    %656 = vmatpush1.msra.mxu0 0.0
    %657 = vmatprep.subr.mxu0 0.0
    %658 = vmatpush1.msra.mxu0 0.0
    %659 = vmatprep.subr.mxu0 0.0
    %660 = vmatpush1.msra.mxu0 0.0
    %661 = vmatprep.subr.mxu0 0.0
    %662 = vmatpush1.msra.mxu0 %v626
    %663 = vmatprep.subr.mxu0 0.0
    %664 = vmatpush1.msra.mxu0 %v625
    %665 = vmatprep.subr.mxu0 0.0
    %666 = vmatpush1.msra.mxu0 %v624
    %667 = vmatprep.subr.mxu0 0.0
    %668 = vmatpush1.msra.mxu0 %v623
    %669 = vmatprep.subr.mxu0 0.0
    %670 = vmatpush2.msra.mxu0 0.0
    %671 = vmatprep.subr.mxu0 0.0
    %672 = vmatpush2.msra.mxu0 0.0
    %673 = vmatprep.subr.mxu0 0.0
    %674 = vmatpush2.msra.mxu0 0.0
    %675 = vmatprep.subr.mxu0 0.0
    %676 = vmatpush2.msra.mxu0 0.0
    %677 = vmatprep.subr.mxu0 0.0
    %678 = vmatpush2.msra.mxu0 0.0
    %679 = vmatprep.subr.mxu0 0.0
    %680 = vmatpush2.msra.mxu0 0.0
    %681 = vmatprep.subr.mxu0 0.0
    %682 = vmatpush2.msra.mxu0 0.0
    %683 = vmatprep.subr.mxu0 0.0
    %684 = vmatpush2.msra.mxu0 0.0
    %685 = vmatprep.subr.mxu0 0.0
    %686 = vmatpush2.msra.mxu0 0.0
    %687 = vmatprep.subr.mxu0 0.0
    %688 = vmatpush2.msra.mxu0 0.0
    %689 = vmatprep.subr.mxu0 0.0
    %690 = vmatpush2.msra.mxu0 0.0
    %691 = vmatprep.subr.mxu0 0.0
    %692 = vmatpush2.msra.mxu0 0.0
    %693 = vmatprep.subr.mxu0 0.0
    %694 = vmatpush2.msra.mxu0 0.0
    %695 = vmatprep.subr.mxu0 0.0
    %696 = vmatpush2.msra.mxu0 0.0
    %697 = vmatprep.subr.mxu0 0.0
    %698 = vmatpush2.msra.mxu0 0.0
    %699 = vmatprep.subr.mxu0 0.0
    %700 = vmatpush2.msra.mxu0 0.0
    %701 = vmatprep.mubr.f32.mxu0 0.0
    %702 = vmatmul.mubr.f32.gmra.mxu0 %v635
    %v703 = vpop.f32.mrf.mxu0
    %v704 = vadd.f32 %v632, %v703
    %v705 = vpop.f32.mrf.mxu0
    %706 = vdwg.mxu0
    %vm707 = vcmask 31744
    %708 = vst.msk [vmem:[%s15] sm:$0xff] %vm707, %v704
    // Predicated region
    $region86: #{aggregate_net_forward.1} parent=1 // pred_check
      _
    $region87: #{aggregate_net_forward.1} parent=1 // pred_check_branch
      %710 = sbr.rel (0) target = $region89
    $region88: #{aggregate_net_forward.1} parent=1 // pred_region
      _
    $region89: #{aggregate_net_forward.1} parent=1 // pred_fallthru
      _
    // Predicated region
    $region90: #{aggregate_net_forward.1} parent=1 // pred_check
      _
    $region91: #{aggregate_net_forward.1} parent=1 // pred_check_branch
      %712 = sbr.rel (0) target = $region93
    $region92: #{aggregate_net_forward.1} parent=1 // pred_region
      _
    $region93: #{aggregate_net_forward.1} parent=1 // pred_fallthru
      _
    %713 = vsyncpa [#allocation3], 1
    %714 = vsyncpa [#allocation5], 1
    %715 = vsyncpa [#allocation8], 1
    %716 = vsyncpa [#allocation11], 1

</llo_original>
